<compile_context>
chip_gen: v6e
topology: v6e:2x2x1
jax: 0.10.0
libtpu: 0.0.40
codegen_flags: <defaults>
</compile_context>

<pallas_src>
import functools
import numpy as np

import jax
import jax.numpy as jnp
from jax import lax
from jax.experimental import pallas as pl
from jax.experimental.pallas import tpu as pltpu


ALPHA = 0.09          # alpha in calc_dvqfscore
EPS_EQ = 0.005        # equality threshold (both p and q)
EPSI = 0.2            # pose-diversity position threshold
MU = 0.22             # pose-diversity quaternion threshold


def _round_up(x, m):
    return ((x + m - 1) // m) * m


def _next_pow2(x):
    return 1 << max(0, int(x) - 1).bit_length()


def _num_tensorcores():
    """Best-effort TensorCores-per-device (megacore detection).

    v5e / v6e expose one TensorCore per device; v4 / v5p / v7x-style devices
    expose two.  Only biases tile-size selection, never correctness.
    """
    try:
        kind = str(getattr(jax.devices()[0], "device_kind", "")).lower()
    except Exception:
        return 2
    if any(t in kind for t in ("lite", "v5e", "v6e", "v6 ")):
        return 1
    return 2


def _pick_tile(N, Hp, n_cores):
    """Candidate tile width (lane axis), multiple of 128.

    vreg-derived ceiling: ~3 live [Hp, TN] f32 temporaries within ~48 of the
    64 vregs -> TN<=2048 for Hp=8, 1024 for Hp=16, 512 for Hp=32, 256 for
    Hp=64.  Single-TC chips take the largest tile (fewer ~0.35us grid steps);
    2-TC chips keep an even tile count so the megacore split is balanced.
    """
    per = max(1, Hp // 8)                                  # vregs per [Hp,128] f32
    tn_max = max(128, min(2048, (48 // (3 * per)) * 128))
    n128 = _round_up(max(int(N), 1), 128)
    if n_cores <= 1 or n128 <= 128:
        return min(tn_max, n128)
    tiles = max(2, -(-n128 // tn_max))
    if tiles % 2:
        tiles += 1
    tn = _round_up(-(-n128 // tiles), 128)
    return max(128, min(tn, tn_max))


def _make_dvqf_kernel(Hp):
    """Kernel over one candidate tile.

    hist_ref [2*Hp, 8]:
      rows [0,Hp):   cols 0-2 = h_p, col 3 = 0.5*||h_p||^2, col 4 = n/2*||h_p-c_p||^2
      rows [Hp,2Hp): cols 0-3 = h_q, col 4 = 0.5*||h_q||^2, col 5 = n/2*||h_q-c_q||^2
    eef_ref [24, TN]:
      rows 0-2  = e_p (rows 3-7 zero so the extra hist_p columns do not
                  contaminate the matmul), rows 8-11 = e_q (rows 12-15 zero),
      rows 16-21 = per-candidate biases:
        16: 0.5*(||e_p||^2 - EPS_EQ)        17: 0.5*(||e_q||^2 - EPS_EQ)
        18: n/2*(inv_n^2*||e_p||^2 + 2*inv_n*c_p.e_p - EPSI)
        19: n/2*(inv_n^2*||e_q||^2 + 2*inv_n*c_q.e_q - MU)
        20: ALPHA * uncertainty (exact, wrapper)  21: candidate-self diversity hit
    count_ref (SMEM scalar prefetch): [1] int32 = H (dynamic history length).
    """

    def kernel(count_ref, hist_ref, eef_ref, out_ref):
        h = count_ref[0]
        valid = lax.broadcasted_iota(jnp.int32, (Hp, 1), 0) < h        # [Hp,1]

        hist_p = hist_ref[0:Hp, :]                                     # [Hp,8]
        hist_q = hist_ref[Hp:2 * Hp, :]                                # [Hp,8]
        eef_p = eef_ref[0:8, :]                                        # [8,TN]
        eef_q = eef_ref[8:16, :]                                       # [8,TN]

        # MXU cross terms (f32 in / f32 out — no bf16 demotion).
        gp = jnp.dot(hist_p, eef_p, preferred_element_type=jnp.float32)  # [Hp,TN]
        gq = jnp.dot(hist_q, eef_q, preferred_element_type=jnp.float32)  # [Hp,TN]

        c1p = hist_p[:, 3:4]
        c2p = hist_p[:, 4:5]
        c1q = hist_q[:, 4:5]
        c2q = hist_q[:, 5:6]

        r1p = eef_ref[16:17, :]
        r1q = eef_ref[17:18, :]
        r2p = eef_ref[18:19, :]
        r2q = eef_ref[19:20, :]
        unc_term = eef_ref[20:21, :]
        div_self = eef_ref[21:22, :]

        # ||h-e||^2 < EPS_EQ  <=>  G > 0.5*||h||^2 + 0.5*(||e||^2 - EPS_EQ)
        # ||h-mean||^2 < thr  <=>  G > n/2*||h-c||^2 + row-bias
        eq_hit = (gp > c1p + r1p) & (gq > c1q + r1q) & valid
        dv_hit = (gp > c2p + r2p) & (gq > c2q + r2q) & valid

        eq_any = jnp.max(jnp.where(eq_hit, 1.0, 0.0), axis=0, keepdims=True)
        dv_any = jnp.maximum(
            jnp.max(jnp.where(dv_hit, 1.0, 0.0), axis=0, keepdims=True), div_self)

        score = unc_term - (1.0 - ALPHA) * dv_any - eq_any             # [1,TN]
        out_ref[...] = jnp.broadcast_to(score, out_ref.shape)

    return kernel


def _score_core(count, hp_buf, hq_buf, eef_ps, eef_qs, Hp, tn, n_real):
    """Traced (to be jitted) score pipeline: block assembly + pallas_call.

    Rows of hp_buf/hq_buf at index >= count MUST be zero (maintained by the
    caller); `count` is a dynamic scalar so history growth within an Hp bucket
    needs no recompile.
    """
    f32 = jnp.float32
    count = jnp.asarray(count, jnp.int32).reshape(())
    hp = hp_buf[:Hp].astype(f32)                       # [Hp,3]
    hq = hq_buf[:Hp].astype(f32)                       # [Hp,4]
    eef_ps = eef_ps.astype(f32)                        # [N,3]
    eef_qs = eef_qs.astype(f32)                        # [N,4]

    n = (count + 1).astype(f32)                        # cat size = H + 1
    inv_n = 1.0 / n
    half_n = 0.5 * n

    c_p = jnp.sum(hp, axis=0) * inv_n                  # sum(hist)/n  [3]
    c_q = jnp.sum(hq, axis=0) * inv_n                  # [4]
    hp2 = jnp.sum(hp * hp, axis=1)                     # [Hp]
    hq2 = jnp.sum(hq * hq, axis=1)
    hcp2 = jnp.sum((hp - c_p) ** 2, axis=1)            # garbage on invalid rows: masked
    hcq2 = jnp.sum((hq - c_q) ** 2, axis=1)

    ep2 = jnp.sum(eef_ps * eef_ps, axis=1)             # [N]
    eq2 = jnp.sum(eef_qs * eef_qs, axis=1)
    cpe = eef_ps @ c_p                                 # [N]
    cqe = eef_qs @ c_q

    # uncertainty via sum-of-squares identity (exact, grid-invariant per cand.)
    cp2 = jnp.sum(c_p * c_p)
    cq2 = jnp.sum(c_q * c_q)
    unc = inv_n * ((jnp.sum(hp2) - n * cp2) + (jnp.sum(hq2) - n * cq2)
                   + (1.0 - inv_n) * (ep2 + eq2) - 2.0 * (cpe + cqe))

    # candidate-vs-cat-mean diversity check (computed exactly in the wrapper)
    mean_p = c_p[None, :] + inv_n * eef_ps
    mean_q = c_q[None, :] + inv_n * eef_qs
    dp_se = jnp.sum((eef_ps - mean_p) ** 2, axis=1)
    dq_se = jnp.sum((eef_qs - mean_q) ** 2, axis=1)
    div_self = jnp.where((dp_se < EPSI) & (dq_se < MU), 1.0, 0.0)

    r1p = 0.5 * (ep2 - EPS_EQ)
    r1q = 0.5 * (eq2 - EPS_EQ)
    r2p = half_n * (inv_n * inv_n * ep2 + 2.0 * inv_n * cpe - EPSI)
    r2q = half_n * (inv_n * inv_n * eq2 + 2.0 * inv_n * cqe - MU)

    Nc = _round_up(n_real, tn)

    hist_blk = jnp.zeros((2 * Hp, 8), f32)
    hist_blk = hist_blk.at[0:Hp, 0:3].set(hp)
    hist_blk = hist_blk.at[0:Hp, 3].set(0.5 * hp2)
    hist_blk = hist_blk.at[0:Hp, 4].set(half_n * hcp2)
    hist_blk = hist_blk.at[Hp:, 0:4].set(hq)
    hist_blk = hist_blk.at[Hp:, 4].set(0.5 * hq2)
    hist_blk = hist_blk.at[Hp:, 5].set(half_n * hcq2)

    eef_blk = jnp.zeros((24, Nc), f32)
    eef_blk = eef_blk.at[0:3, :n_real].set(eef_ps.T)
    eef_blk = eef_blk.at[8:12, :n_real].set(eef_qs.T)
    aux = jnp.stack([r1p, r1q, r2p, r2q, ALPHA * unc, div_self], axis=0)  # [6,N]
    eef_blk = eef_blk.at[16:22, :n_real].set(aux)

    cnt = count.reshape((1,))

    kernel = _make_dvqf_kernel(Hp)
    scores_pad = pl.pallas_call(
        kernel,
        out_shape=jax.ShapeDtypeStruct((8, Nc), f32),
        grid_spec=pltpu.PrefetchScalarGridSpec(
            num_scalar_prefetch=1,                               # count -> SMEM
            grid=(Nc // tn,),
            in_specs=[
                # constant index_map: Pallas DMAs the whole history once
                pl.BlockSpec((2 * Hp, 8), lambda i, c: (0, 0)),
                pl.BlockSpec((24, tn), lambda i, c: (0, i)),     # candidate tile
            ],
            out_specs=pl.BlockSpec((8, tn), lambda i, c: (0, i)),
        ),
        compiler_params=pltpu.CompilerParams(
            dimension_semantics=("parallel",)),
    )(cnt, hist_blk, eef_blk)

    return scores_pad[0, :n_real]


@functools.partial(jax.jit, static_argnames=("Hp", "tn", "n_real"))
def _scores_jit(count, hp_buf, hq_buf, eef_ps, eef_qs, *, Hp, tn, n_real):
    return _score_core(count, hp_buf, hq_buf, eef_ps, eef_qs, Hp, tn, n_real)


@functools.partial(jax.jit, static_argnames=("Hp", "tn", "n_real"))
def _forward_jit(count, hp_buf, hq_buf, eef_ps, eef_qs, qposes, *, Hp, tn, n_real):
    # Everything (block assembly, kernel, argmax, selection, history append)
    # in one dispatch — the dominant end-to-end latency fix per the review.
    scores = _score_core(count, hp_buf, hq_buf, eef_ps, eef_qs, Hp, tn, n_real)
    tid = jnp.argmax(scores)                       # first max wins (same as loop)
    next_qpos = jnp.take(qposes, tid, axis=0)
    sel_p = jnp.take(eef_ps, tid, axis=0).astype(hp_buf.dtype)
    sel_q = jnp.take(eef_qs, tid, axis=0).astype(hq_buf.dtype)
    count = jnp.asarray(count, jnp.int32)
    new_hp = hp_buf.at[count].set(sel_p)
    new_hq = hq_buf.at[count].set(sel_q)
    return scores, tid, next_qpos, new_hp, new_hq


def dvqf_scores(history_p, history_q, eef_ps, eef_qs, count=None):
    """Vectorized calc_dvqfscore over all candidate eef poses. Returns [N] f32."""
    history_p = jnp.asarray(history_p, jnp.float32)
    history_q = jnp.asarray(history_q, jnp.float32)
    eef_ps = jnp.asarray(eef_ps, jnp.float32)
    eef_qs = jnp.asarray(eef_qs, jnp.float32)
    if count is None:
        count = int(history_p.shape[0])
    count = int(count)
    N = int(eef_ps.shape[0])
    Hp = max(8, _next_pow2(max(count, 1)))
    tn = _pick_tile(N, Hp, _num_tensorcores())
    hp_buf = jnp.zeros((Hp, 3), jnp.float32).at[:count].set(history_p[:count])
    hq_buf = jnp.zeros((Hp, 4), jnp.float32).at[:count].set(history_q[:count])
    return _scores_jit(jnp.int32(count), hp_buf, hq_buf, eef_ps, eef_qs,
                       Hp=Hp, tn=tn, n_real=N)


class SpaceExplorerDVQF:
    """JAX/Pallas re-implementation of the numeric forward pass.

    The SAPIEN engine, URDF/IK qpos sampling, collision checking, checkpoint
    I/O and Vis3D calls of the original module have no Pallas equivalent;
    candidate qposes and their eef poses are supplied directly.  History is
    stored in fixed-capacity (power-of-two) buffers with an integer count so
    kernel shapes stay bucketed as the history grows.
    """

    DEFAULT_CAPACITY = 64

    def __init__(self, history_p, history_q, capacity=DEFAULT_CAPACITY):
        if history_p is None:
            history_p = jnp.zeros((0, 3), jnp.float32)
            history_q = jnp.zeros((0, 4), jnp.float32)
        history_p = jnp.asarray(history_p, jnp.float32)
        history_q = jnp.asarray(history_q, jnp.float32)
        h = int(history_p.shape[0])
        cap = _next_pow2(max(int(capacity), h, 8))
        self._cap = cap
        self._count = h
        self._hp = jnp.zeros((cap, 3), jnp.float32).at[:h].set(history_p)
        self._hq = jnp.zeros((cap, 4), jnp.float32).at[:h].set(history_q)
        self.dummy = jnp.zeros((1,), jnp.float32)      # nn.Parameter(torch.zeros(1))
        self._n_cores = _num_tensorcores()

    @property
    def history_p(self):
        return self._hp[:self._count]

    @property
    def history_q(self):
        return self._hq[:self._count]

    def forward(self, dps):
        to_zero = dps.get("to_zero", False)
        qposes = jnp.asarray(dps["qposes"], jnp.float32)
        if to_zero:
            tid = 0
            return ({"qpos": qposes[tid], "qpos_idx": tid}, {})

        eef_ps = jnp.asarray(dps["eef_ps"], jnp.float32)
        eef_qs = jnp.asarray(dps["eef_qs"], jnp.float32)
        N = int(eef_ps.shape[0])

        if self._count >= self._cap:                    # rare host-side growth
            new_cap = self._cap * 2
            self._hp = jnp.zeros((new_cap, 3), jnp.float32).at[:self._cap].set(self._hp)
            self._hq = jnp.zeros((new_cap, 4), jnp.float32).at[:self._cap].set(self._hq)
            self._cap = new_cap

        Hp = min(self._cap, max(8, _next_pow2(max(self._count, 1))))
        tn = _pick_tile(N, Hp, self._n_cores)

        scores, tid, next_qpos, new_hp, new_hq = _forward_jit(
            jnp.int32(self._count), self._hp, self._hq, eef_ps, eef_qs, qposes,
            Hp=Hp, tn=tn, n_real=N)

        self._hp, self._hq = new_hp, new_hq
        self._count += 1
        # TODO(synk): torch.save checkpoint write of history has no JAX/Pallas equivalent.

        outputs = {"qpos": next_qpos, "qpos_idx": tid, "scores": scores}
        return (outputs, {})


# ------------------------- pure-numpy reference -------------------------
def _ref_dvqf_score(eef_p, eef_q, hp, hq):
    eqal = 0.0
    for i in range(hp.shape[0]):
        if np.sum((hp[i] - eef_p) ** 2) < EPS_EQ and np.sum((hq[i] - eef_q) ** 2) < EPS_EQ:
            eqal = -1.0
    cat_p = np.concatenate([hp, eef_p[None]], axis=0)
    cat_q = np.concatenate([hq, eef_q[None]], axis=0)
    n = cat_p.shape[0]
    mean_p = cat_p.sum(0) / n
    mean_q = cat_q.sum(0) / n
    unc = np.sum((cat_p - mean_p) ** 2) / n + np.sum((cat_q - mean_q) ** 2) / n
    pd = 0.0
    for i in range(n):
        if np.sum((cat_p[i] - mean_p) ** 2) < EPSI and np.sum((cat_q[i] - mean_q) ** 2) < MU:
            pd = -1.0
            break
    return ALPHA * unc + (1 - ALPHA) * pd + eqal


if __name__ == "__main__":
    key = jax.random.PRNGKey(0)
    k1, k2, k3, k4, k5 = jax.random.split(key, 5)

    H = 6          # history length
    N = 37         # number of sampled candidate qposes / eef poses
    total_dof = 9

    history_p = jax.random.uniform(k1, (H, 3), jnp.float32, 0.2, 0.8)
    hqr = jax.random.normal(k2, (H, 4), jnp.float32)
    history_q = hqr / jnp.linalg.norm(hqr, axis=-1, keepdims=True)

    eef_ps = jax.random.uniform(k3, (N, 3), jnp.float32, 0.2, 0.8)
    eqr = jax.random.normal(k4, (N, 4), jnp.float32)
    eef_qs = eqr / jnp.linalg.norm(eqr, axis=-1, keepdims=True)
    # make one candidate identical to a history entry to exercise `eqal`
    eef_ps = eef_ps.at[5].set(history_p[2])
    eef_qs = eef_qs.at[5].set(history_q[2])

    qposes = jax.random.uniform(k5, (N, total_dof), jnp.float32, -1.0, 1.0)

    model = SpaceExplorerDVQF(history_p, history_q)

    # ---- call 1 ----
    outputs, _ = model.forward({"qposes": qposes, "eef_ps": eef_ps, "eef_qs": eef_qs})
    scores = np.asarray(jax.block_until_ready(outputs["scores"]))

    hp_np = np.asarray(history_p)
    hq_np = np.asarray(history_q)
    ref = np.array([_ref_dvqf_score(np.asarray(eef_ps[i]), np.asarray(eef_qs[i]), hp_np, hq_np)
                    for i in range(N)], dtype=np.float32)
    np.testing.assert_allclose(scores, ref, rtol=1e-4, atol=1e-5)
    tid = int(outputs["qpos_idx"])
    assert np.isclose(ref[tid], ref.max(), atol=1e-5)
    assert outputs["qpos"].shape == (total_dof,)

    # ---- call 2: history grew by 1 (dynamic count, same Hp bucket -> same program) ----
    hp_np2 = np.asarray(model.history_p)
    hq_np2 = np.asarray(model.history_q)
    outputs2, _ = model.forward({"qposes": qposes, "eef_ps": eef_ps, "eef_qs": eef_qs})
    scores2 = np.asarray(jax.block_until_ready(outputs2["scores"]))
    ref2 = np.array([_ref_dvqf_score(np.asarray(eef_ps[i]), np.asarray(eef_qs[i]), hp_np2, hq_np2)
                     for i in range(N)], dtype=np.float32)
    np.testing.assert_allclose(scores2, ref2, rtol=1e-4, atol=1e-5)
    assert outputs2["qpos"].shape == (total_dof,)

    print("KERNEL_OK")
</pallas_src>

<mosaic_0001>
module attributes {stable_mosaic.version = 11 : i64} {
  func.func @kernel(%arg0: i32, %arg1: memref<1xi32, #tpu.memory_space<smem>>, %arg2: memref<16x8xf32, #tpu.memory_space<vmem>>, %arg3: memref<24x128xf32, #tpu.memory_space<vmem>>, %arg4: memref<8x128xf32, #tpu.memory_space<vmem>>) attributes {dimension_semantics = [#tpu.dimension_semantics<parallel>], iteration_bounds = array<i64: 1>, scalar_prefetch = 1 : i64, scratch_operands = 0 : i64, tpu.core_type = #tpu.core_type<tc>, window_params = [{pipeline_mode = #tpu.pipeline_mode<synchronous>, transform_indices = @transform_0, window_bounds = array<i64: 16, 8>}, {transform_indices = @transform_1, window_bounds = array<i64: 24, 128>}, {transform_indices = @transform_2, window_bounds = array<i64: 8, 128>}]} {
    %c0 = arith.constant 0 : index
    %0 = memref.load %arg1[%c0] : memref<1xi32, #tpu.memory_space<smem>>
    %1 = tpu.iota {dimensions = array<i32: 0>} : vector<8x1xi32>
    %2 = vector.broadcast %0 : i32 to vector<8x1xi32>
    %3 = arith.cmpi slt, %1, %2 : vector<8x1xi32>
    %c0_0 = arith.constant 0 : index
    %c0_1 = arith.constant 0 : index
    %4 = vector.load %arg2[%c0_0, %c0_1] : memref<16x8xf32, #tpu.memory_space<vmem>>, vector<8x8xf32>
    %c8 = arith.constant 8 : index
    %c0_2 = arith.constant 0 : index
    %5 = vector.load %arg2[%c8, %c0_2] : memref<16x8xf32, #tpu.memory_space<vmem>>, vector<8x8xf32>
    %c0_3 = arith.constant 0 : index
    %c0_4 = arith.constant 0 : index
    %6 = vector.load %arg3[%c0_3, %c0_4] : memref<24x128xf32, #tpu.memory_space<vmem>>, vector<8x128xf32>
    %c8_5 = arith.constant 8 : index
    %c0_6 = arith.constant 0 : index
    %7 = vector.load %arg3[%c8_5, %c0_6] : memref<24x128xf32, #tpu.memory_space<vmem>>, vector<8x128xf32>
    %cst = arith.constant dense<0.000000e+00> : vector<8x128xf32>
    %8 = tpu.matmul %4, %6, %cst {dimension_numbers = #tpu.dot_dimension_numbers<[1], [0], [0], [1], [0, 0, 1, 1], [], []>} : vector<8x8xf32>, vector<8x128xf32>, vector<8x128xf32> -> vector<8x128xf32>
    %cst_7 = arith.constant dense<0.000000e+00> : vector<8x128xf32>
    %9 = tpu.matmul %5, %7, %cst_7 {dimension_numbers = #tpu.dot_dimension_numbers<[1], [0], [0], [1], [0, 0, 1, 1], [], []>} : vector<8x8xf32>, vector<8x128xf32>, vector<8x128xf32> -> vector<8x128xf32>
    %10 = vector.extract_strided_slice %4 {offsets = [0, 3], sizes = [8, 1], strides = [1, 1]} : vector<8x8xf32> to vector<8x1xf32>
    %11 = vector.extract_strided_slice %4 {offsets = [0, 4], sizes = [8, 1], strides = [1, 1]} : vector<8x8xf32> to vector<8x1xf32>
    %12 = vector.extract_strided_slice %5 {offsets = [0, 4], sizes = [8, 1], strides = [1, 1]} : vector<8x8xf32> to vector<8x1xf32>
    %13 = vector.extract_strided_slice %5 {offsets = [0, 5], sizes = [8, 1], strides = [1, 1]} : vector<8x8xf32> to vector<8x1xf32>
    %c16 = arith.constant 16 : index
    %c0_8 = arith.constant 0 : index
    %14 = vector.load %arg3[%c16, %c0_8] : memref<24x128xf32, #tpu.memory_space<vmem>>, vector<1x128xf32>
    %c17 = arith.constant 17 : index
    %c0_9 = arith.constant 0 : index
    %15 = vector.load %arg3[%c17, %c0_9] : memref<24x128xf32, #tpu.memory_space<vmem>>, vector<1x128xf32>
    %c18 = arith.constant 18 : index
    %c0_10 = arith.constant 0 : index
    %16 = vector.load %arg3[%c18, %c0_10] : memref<24x128xf32, #tpu.memory_space<vmem>>, vector<1x128xf32>
    %c19 = arith.constant 19 : index
    %c0_11 = arith.constant 0 : index
    %17 = vector.load %arg3[%c19, %c0_11] : memref<24x128xf32, #tpu.memory_space<vmem>>, vector<1x128xf32>
    %c20 = arith.constant 20 : index
    %c0_12 = arith.constant 0 : index
    %18 = vector.load %arg3[%c20, %c0_12] : memref<24x128xf32, #tpu.memory_space<vmem>>, vector<1x128xf32>
    %c21 = arith.constant 21 : index
    %c0_13 = arith.constant 0 : index
    %19 = vector.load %arg3[%c21, %c0_13] : memref<24x128xf32, #tpu.memory_space<vmem>>, vector<1x128xf32>
    %20 = vector.broadcast %10 : vector<8x1xf32> to vector<8x128xf32>
    %21 = vector.broadcast %14 : vector<1x128xf32> to vector<8x128xf32>
    %22 = arith.addf %20, %21 : vector<8x128xf32>
    %23 = arith.cmpf ogt, %8, %22 : vector<8x128xf32>
    %24 = vector.broadcast %12 : vector<8x1xf32> to vector<8x128xf32>
    %25 = vector.broadcast %15 : vector<1x128xf32> to vector<8x128xf32>
    %26 = arith.addf %24, %25 : vector<8x128xf32>
    %27 = arith.cmpf ogt, %9, %26 : vector<8x128xf32>
    %28 = arith.andi %23, %27 : vector<8x128xi1>
    %29 = vector.broadcast %3 : vector<8x1xi1> to vector<8x128xi1>
    %30 = arith.andi %28, %29 : vector<8x128xi1>
    %31 = vector.broadcast %11 : vector<8x1xf32> to vector<8x128xf32>
    %32 = vector.broadcast %16 : vector<1x128xf32> to vector<8x128xf32>
    %33 = arith.addf %31, %32 : vector<8x128xf32>
    %34 = arith.cmpf ogt, %8, %33 : vector<8x128xf32>
    %35 = vector.broadcast %13 : vector<8x1xf32> to vector<8x128xf32>
    %36 = vector.broadcast %17 : vector<1x128xf32> to vector<8x128xf32>
    %37 = arith.addf %35, %36 : vector<8x128xf32>
    %38 = arith.cmpf ogt, %9, %37 : vector<8x128xf32>
    %39 = arith.andi %34, %38 : vector<8x128xi1>
    %40 = vector.broadcast %3 : vector<8x1xi1> to vector<8x128xi1>
    %41 = arith.andi %39, %40 : vector<8x128xi1>
    %cst_14 = arith.constant 1.000000e+00 : f32
    %cst_15 = arith.constant 0.000000e+00 : f32
    %42 = vector.broadcast %cst_14 : f32 to vector<8x128xf32>
    %43 = vector.broadcast %cst_15 : f32 to vector<8x128xf32>
    %44 = arith.select %30, %42, %43 : vector<8x128xi1>, vector<8x128xf32>
    %cst_16 = arith.constant dense<0xFF800000> : vector<128xf32>
    %45 = vector.multi_reduction <maximumf>, %44, %cst_16 [0] : vector<8x128xf32> to vector<128xf32>
    %46 = vector.shape_cast %45 : vector<128xf32> to vector<1x128xf32>
    %cst_17 = arith.constant 1.000000e+00 : f32
    %cst_18 = arith.constant 0.000000e+00 : f32
    %47 = vector.broadcast %cst_17 : f32 to vector<8x128xf32>
    %48 = vector.broadcast %cst_18 : f32 to vector<8x128xf32>
    %49 = arith.select %41, %47, %48 : vector<8x128xi1>, vector<8x128xf32>
    %cst_19 = arith.constant dense<0xFF800000> : vector<128xf32>
    %50 = vector.multi_reduction <maximumf>, %49, %cst_19 [0] : vector<8x128xf32> to vector<128xf32>
    %51 = vector.shape_cast %50 : vector<128xf32> to vector<1x128xf32>
    %52 = arith.maximumf %51, %19 : vector<1x128xf32>
    %cst_20 = arith.constant 9.100000e-01 : f32
    %53 = vector.broadcast %cst_20 : f32 to vector<1x128xf32>
    %54 = arith.mulf %53, %52 : vector<1x128xf32>
    %55 = arith.subf %18, %54 : vector<1x128xf32>
    %56 = arith.subf %55, %46 : vector<1x128xf32>
    %57 = vector.shape_cast %56 : vector<1x128xf32> to vector<1x128xf32>
    %58 = vector.broadcast %57 : vector<1x128xf32> to vector<8x128xf32>
    %c0_21 = arith.constant 0 : index
    %c0_22 = arith.constant 0 : index
    %59 = vector.load %arg4[%c0_21, %c0_22] : memref<8x128xf32, #tpu.memory_space<vmem>>, vector<8x128xf32>
    tpu.vector_store %arg4[%c0_21, %c0_22], %58 {strides = array<i32>} : memref<8x128xf32, #tpu.memory_space<vmem>>, vector<8x128xf32>,
    return
  }
  func.func @transform_0(%arg0: i32, %arg1: memref<1xi32, #tpu.memory_space<smem>>) -> (i32, i32) {
    %c0_i32 = arith.constant 0 : i32
    %c0_i32_0 = arith.constant 0 : i32
    %c0_i32_1 = arith.constant 0 : i32
    return %c0_i32, %c0_i32_0 : i32, i32
  }
  func.func @transform_1(%arg0: i32, %arg1: memref<1xi32, #tpu.memory_space<smem>>) -> (i32, i32) {
    %c0_i32 = arith.constant 0 : i32
    %c0_i32_0 = arith.constant 0 : i32
    return %c0_i32, %arg0 : i32, i32
  }
  func.func @transform_2(%arg0: i32, %arg1: memref<1xi32, #tpu.memory_space<smem>>) -> (i32, i32) {
    %c0_i32 = arith.constant 0 : i32
    %c0_i32_0 = arith.constant 0 : i32
    return %c0_i32, %arg0 : i32, i32
  }
}

</mosaic_0001>

<llo_original>
// kernel: _forward_jit.1
$region0: #{_forward_jit.1}
  #allocation0 [shape = 'u32[]', space=smem, size = 0x4, offset = 0x4, fixed_abs, tag = 'smem constant byte address 0x4 - core index']
  #allocation1 [shape = 'u32[144,128]{1,0:T(1,128)}', space=vmem, size = 0x12000, scoped, tag = 'internal scratch']
  #allocation2 [shape = 's32[1]{0}', space=sflag, size = 0x4, scoped, tag = 'scoped memory for _forward_jit.1']
  #allocation3 [shape = 's32[1]{0:T(128)S(6)}', space=smem, size = 0x200, scoped, tag = 'prefetched SMEM operand 0']
  %s0 = inlined_call_operand.<no memory space> [shape: s32[1], index: 0, kind: input, shape index: {}]
  %s1 = inlined_call_operand.vmem [shape: f32[16,8], index: 1, kind: input, shape index: {}]
  %s2 = inlined_call_operand.vmem [shape: f32[24,128], index: 2, kind: input, shape index: {}]
  %s3 = inlined_call_operand.vmem [shape: f32[8,128], index: 3, kind: output, shape index: {}]
  %s4 = sld [smem:[#allocation0]]
  $region18: #{_forward_jit.1} parent=0
    _
  %s6 = ssub.s32 1, %s4
  %s7 = scalar_select 0, %s6, %s4
  %8 = sst [smem:[#allocation3]] %s0
  // Predicated region
  $region2: #{_forward_jit.1} parent=0 // pred_check
    _
  $region3: #{_forward_jit.1} parent=0 // pred_check_branch
    %10 = sbr.rel (0) target = $region5
  $region4: #{_forward_jit.1} parent=0 // pred_region
    _
  $region5: #{_forward_jit.1} parent=0 // pred_fallthru
    _
  // Predicated region
  $region6: #{_forward_jit.1} parent=0 // pred_check
    _
  $region7: #{_forward_jit.1} parent=0 // pred_check_branch
    %12 = sbr.rel (0) target = $region9
  $region8: #{_forward_jit.1} parent=0 // pred_region
    _
  $region9: #{_forward_jit.1} parent=0 // pred_fallthru
    _
  %s13 = sld [smem:[#allocation3]]
  %v14 = vlaneseq
  %v15 = vshrl.u32 %v14, 7
  %v16 = vstv %s13
  %vm17 = vcmp.lt.s32.totalorder %v15, %v16
  %v18 = vld [vmem:[%s1] sm:$0xff]
  %v19 = vld [vmem:[%s1 + $0x8] sm:$0xff]
  %v20 = vld [vmem:[%s2] sm:$0xff]
  %v21 = vld [vmem:[%s2 + $0x8] sm:$0xff]
  %vm22 = vcmask 64512
  %v24 = vsel %vm22, %v18, 0
  %26 = vmatprep.subr.mxu0 0.0
  %27 = vmatpush1.msra.mxu0 0.0
  %28 = vmatprep.subr.mxu0 0.0
  %29 = vmatpush1.msra.mxu0 0.0
  %30 = vmatprep.subr.mxu0 0.0
  %31 = vmatpush1.msra.mxu0 0.0
  %32 = vmatprep.subr.mxu0 0.0
  %33 = vmatpush1.msra.mxu0 0.0
  %34 = vmatprep.subr.mxu0 0.0
  %35 = vmatpush1.msra.mxu0 0.0
  %36 = vmatprep.subr.mxu0 0.0
  %37 = vmatpush1.msra.mxu0 0.0
  %38 = vmatprep.subr.mxu0 0.0
  %39 = vmatpush1.msra.mxu0 0.0
  %40 = vmatprep.subr.mxu0 0.0
  %41 = vmatpush1.msra.mxu0 0.0
  %42 = vmatprep.subr.mxu0 0.0
  %43 = vmatpush1.msra.mxu0 0.0
  %44 = vmatprep.subr.mxu0 0.0
  %45 = vmatpush1.msra.mxu0 0.0
  %46 = vmatprep.subr.mxu0 0.0
  %47 = vmatpush1.msra.mxu0 0.0
  %48 = vmatprep.subr.mxu0 0.0
  %49 = vmatpush1.msra.mxu0 0.0
  %50 = vmatprep.subr.mxu0 0.0
  %51 = vmatpush1.msra.mxu0 0.0
  %52 = vmatprep.subr.mxu0 0.0
  %53 = vmatpush1.msra.mxu0 0.0
  %54 = vmatprep.subr.mxu0 0.0
  %55 = vmatpush1.msra.mxu0 0.0
  %56 = vmatprep.subr.mxu0 0.0
  %57 = vmatpush1.msra.mxu0 %v20
  %58 = vmatprep.subr.mxu0 0.0
  %59 = vmatpush2.msra.mxu0 0.0
  %60 = vmatprep.subr.mxu0 0.0
  %61 = vmatpush2.msra.mxu0 0.0
  %62 = vmatprep.subr.mxu0 0.0
  %63 = vmatpush2.msra.mxu0 0.0
  %64 = vmatprep.subr.mxu0 0.0
  %65 = vmatpush2.msra.mxu0 0.0
  %66 = vmatprep.subr.mxu0 0.0
  %67 = vmatpush2.msra.mxu0 0.0
  %68 = vmatprep.subr.mxu0 0.0
  %69 = vmatpush2.msra.mxu0 0.0
  %70 = vmatprep.subr.mxu0 0.0
  %71 = vmatpush2.msra.mxu0 0.0
  %72 = vmatprep.subr.mxu0 0.0
  %73 = vmatpush2.msra.mxu0 0.0
  %74 = vmatprep.subr.mxu0 0.0
  %75 = vmatpush2.msra.mxu0 0.0
  %76 = vmatprep.subr.mxu0 0.0
  %77 = vmatpush2.msra.mxu0 0.0
  %78 = vmatprep.subr.mxu0 0.0
  %79 = vmatpush2.msra.mxu0 0.0
  %80 = vmatprep.subr.mxu0 0.0
  %81 = vmatpush2.msra.mxu0 0.0
  %82 = vmatprep.subr.mxu0 0.0
  %83 = vmatpush2.msra.mxu0 0.0
  %84 = vmatprep.subr.mxu0 0.0
  %85 = vmatpush2.msra.mxu0 0.0
  %86 = vmatprep.subr.mxu0 0.0
  %87 = vmatpush2.msra.mxu0 0.0
  %88 = vmatprep.subr.mxu0 0.0
  %89 = vmatpush2.msra.mxu0 0.0
  %90 = vmatprep.mubr.f32.mxu0 0.0
  %91 = vmatmul.mubr.f32.gmra.mxu0 %v24
  %v92 = vpop.f32.mrf.mxu0
  %v93 = vadd.f32 0.0, %v92
  %v94 = vpop.f32.mrf.mxu0
  %95 = vdwg.mxu0
  %v97 = vsel %vm22, %v19, 0
  %99 = vmatprep.subr.mxu0 0.0
  %100 = vmatpush1.msra.mxu0 0.0
  %101 = vmatprep.subr.mxu0 0.0
  %102 = vmatpush1.msra.mxu0 0.0
  %103 = vmatprep.subr.mxu0 0.0
  %104 = vmatpush1.msra.mxu0 0.0
  %105 = vmatprep.subr.mxu0 0.0
  %106 = vmatpush1.msra.mxu0 0.0
  %107 = vmatprep.subr.mxu0 0.0
  %108 = vmatpush1.msra.mxu0 0.0
  %109 = vmatprep.subr.mxu0 0.0
  %110 = vmatpush1.msra.mxu0 0.0
  %111 = vmatprep.subr.mxu0 0.0
  %112 = vmatpush1.msra.mxu0 0.0
  %113 = vmatprep.subr.mxu0 0.0
  %114 = vmatpush1.msra.mxu0 0.0
  %115 = vmatprep.subr.mxu0 0.0
  %116 = vmatpush1.msra.mxu0 0.0
  %117 = vmatprep.subr.mxu0 0.0
  %118 = vmatpush1.msra.mxu0 0.0
  %119 = vmatprep.subr.mxu0 0.0
  %120 = vmatpush1.msra.mxu0 0.0
  %121 = vmatprep.subr.mxu0 0.0
  %122 = vmatpush1.msra.mxu0 0.0
  %123 = vmatprep.subr.mxu0 0.0
  %124 = vmatpush1.msra.mxu0 0.0
  %125 = vmatprep.subr.mxu0 0.0
  %126 = vmatpush1.msra.mxu0 0.0
  %127 = vmatprep.subr.mxu0 0.0
  %128 = vmatpush1.msra.mxu0 0.0
  %129 = vmatprep.subr.mxu0 0.0
  %130 = vmatpush1.msra.mxu0 %v21
  %131 = vmatprep.subr.mxu0 0.0
  %132 = vmatpush2.msra.mxu0 0.0
  %133 = vmatprep.subr.mxu0 0.0
  %134 = vmatpush2.msra.mxu0 0.0
  %135 = vmatprep.subr.mxu0 0.0
  %136 = vmatpush2.msra.mxu0 0.0
  %137 = vmatprep.subr.mxu0 0.0
  %138 = vmatpush2.msra.mxu0 0.0
  %139 = vmatprep.subr.mxu0 0.0
  %140 = vmatpush2.msra.mxu0 0.0
  %141 = vmatprep.subr.mxu0 0.0
  %142 = vmatpush2.msra.mxu0 0.0
  %143 = vmatprep.subr.mxu0 0.0
  %144 = vmatpush2.msra.mxu0 0.0
  %145 = vmatprep.subr.mxu0 0.0
  %146 = vmatpush2.msra.mxu0 0.0
  %147 = vmatprep.subr.mxu0 0.0
  %148 = vmatpush2.msra.mxu0 0.0
  %149 = vmatprep.subr.mxu0 0.0
  %150 = vmatpush2.msra.mxu0 0.0
  %151 = vmatprep.subr.mxu0 0.0
  %152 = vmatpush2.msra.mxu0 0.0
  %153 = vmatprep.subr.mxu0 0.0
  %154 = vmatpush2.msra.mxu0 0.0
  %155 = vmatprep.subr.mxu0 0.0
  %156 = vmatpush2.msra.mxu0 0.0
  %157 = vmatprep.subr.mxu0 0.0
  %158 = vmatpush2.msra.mxu0 0.0
  %159 = vmatprep.subr.mxu0 0.0
  %160 = vmatpush2.msra.mxu0 0.0
  %161 = vmatprep.subr.mxu0 0.0
  %162 = vmatpush2.msra.mxu0 0.0
  %163 = vmatprep.mubr.f32.mxu0 0.0
  %164 = vmatmul.mubr.f32.gmra.mxu0 %v97
  %v165 = vpop.f32.mrf.mxu0
  %v166 = vadd.f32 0.0, %v165
  %v167 = vpop.f32.mrf.mxu0
  %168 = vdwg.mxu0
  %v169 = vld [vmem:[%s2 + $0x10] sm:$0x1]
  %v170 = vld [vmem:[%s2 + $0x11] sm:$0x1]
  %v171 = vld [vmem:[%s2 + $0x12] sm:$0x1]
  %v172 = vld [vmem:[%s2 + $0x13] sm:$0x1]
  %v173 = vld [vmem:[%s2 + $0x14] sm:$0x1]
  %v174 = vld [vmem:[%s2 + $0x15] sm:$0x1]
  %175 = vset.pattern.permute.xlu0 3
  %176 = vperm.xlu0 %175, %v18
  %v177 = vpop.permute.xlu0 %176
  %v179 = vlaneseq
  %v180 = vshrl.u32 %v179, 7
  %v181 = vsub.s32 0, %v180
  %v182 = vrot.slane %v169, %v181
  %v183 = vadd.f32 %v177, %v182
  %vm184 = vcmp.gt.f32.partialorder %v93, %v183
  %185 = vset.pattern.permute.xlu0 4
  %186 = vperm.xlu0 %185, %v19
  %v187 = vpop.permute.xlu0 %186
  %v189 = vlaneseq
  %v190 = vshrl.u32 %v189, 7
  %v191 = vsub.s32 0, %v190
  %v192 = vrot.slane %v170, %v191
  %v193 = vadd.f32 %v187, %v192
  %vm194 = vcmp.gt.f32.partialorder %v166, %v193
  %vm195 = vmand %vm184, %vm194
  %v196 = vsel %vm17, 1, 0
  %vm197 = vcmp.eq.s32.totalorder %v196, 1
  %vm198 = vmand %vm195, %vm197
  %199 = vset.pattern.permute.xlu0 4
  %200 = vperm.xlu0 %199, %v18
  %v201 = vpop.permute.xlu0 %200
  %v203 = vlaneseq
  %v204 = vshrl.u32 %v203, 7
  %v205 = vsub.s32 0, %v204
  %v206 = vrot.slane %v171, %v205
  %v207 = vadd.f32 %v201, %v206
  %vm208 = vcmp.gt.f32.partialorder %v93, %v207
  %209 = vset.pattern.permute.xlu0 5
  %210 = vperm.xlu0 %209, %v19
  %v211 = vpop.permute.xlu0 %210
  %v213 = vlaneseq
  %v214 = vshrl.u32 %v213, 7
  %v215 = vsub.s32 0, %v214
  %v216 = vrot.slane %v172, %v215
  %v217 = vadd.f32 %v211, %v216
  %vm218 = vcmp.gt.f32.partialorder %v166, %v217
  %vm219 = vmand %vm208, %vm218
  %vm220 = vmand %vm219, %vm197
  %v221 = vsel %vm198, 1.0, 0.0
  %v222 = vrot.slane %v221, 4
  %v223 = vmax.f32 %v221, %v222
  %v224 = vrot.slane %v223, 2
  %v225 = vmax.f32 %v223, %v224
  %v226 = vrot.slane %v225, 1
  %v227 = vmax.f32 %v225, %v226
  %v228 = vsel %vm220, 1.0, 0.0
  %v229 = vrot.slane %v228, 4
  %v230 = vmax.f32 %v228, %v229
  %v231 = vrot.slane %v230, 2
  %v232 = vmax.f32 %v230, %v231
  %v233 = vrot.slane %v232, 1
  %v234 = vmax.f32 %v232, %v233
  %v235 = vmax.f32 %v234, %v174
  %v236 = vmul.f32 %v235, 0.91
  %v237 = vsub.f32 %v173, %v236
  %v238 = vsub.f32 %v237, %v227
  %v239 = vlaneseq
  %v240 = vshrl.u32 %v239, 7
  %v241 = vsub.s32 0, %v240
  %v242 = vrot.slane %v238, %v241
  %243 = vst [vmem:[%s3] sm:$0xff] %v242
  // Predicated region
  $region10: #{_forward_jit.1} parent=0 // pred_check
    _
  $region11: #{_forward_jit.1} parent=0 // pred_check_branch
    %245 = sbr.rel (0) target = $region13
  $region12: #{_forward_jit.1} parent=0 // pred_region
    _
  $region13: #{_forward_jit.1} parent=0 // pred_fallthru
    _
  // Predicated region
  $region14: #{_forward_jit.1} parent=0 // pred_check
    _
  $region15: #{_forward_jit.1} parent=0 // pred_check_branch
    %247 = sbr.rel (0) target = $region17
  $region16: #{_forward_jit.1} parent=0 // pred_region
    _
  $region17: #{_forward_jit.1} parent=0 // pred_fallthru
    _

</llo_original>
